<compile_context>
chip_gen: v6e
topology: v6e:2x2x1
jax: 0.10.0
libtpu: 0.0.40
codegen_flags: <defaults>
</compile_context>

<pallas_src>
import jax
import jax.numpy as jnp
from jax.experimental import pallas as pl
from jax.experimental.pallas import tpu as pltpu


def _identity_copy_kernel(x_ref, o_ref):
    # forward(x) == lastlayeractfn(x) == Identity(x); all Linear/ReLU results
    # in the reference are dead and intentionally not computed here.
    o_ref[...] = x_ref[...]


def neural_network_forward(x, params=None, *, max_rows_per_tile=2048):
    """Mirrors NeuralNetwork.forward: returns Identity(x).

    `params` (list of (W [out,in], b [1,out])) is accepted for interface
    parity with the PyTorch module but is unused: every Linear output in the
    reference forward is overwritten before use.
    """
    del params  # dead in the reference forward

    B, D = x.shape
    total = B * D
    LANE = 128

    # Present a lane-dense (last dim == multiple-of-128) slab for the copy
    # path when the element count allows it; otherwise keep the native shape.
    if total % LANE == 0:
        rows, cols = total // LANE, LANE
    else:
        rows, cols = B, D
    x2 = x.reshape(rows, cols)

    # Pick the largest row tile (multiple of 8, divides rows) up to the cap;
    # small inputs use a single full-array block (grid=(1,)).
    if rows % 8 == 0 and rows > max_rows_per_tile:
        tile = max_rows_per_tile - (max_rows_per_tile % 8)
        while tile > 8 and rows % tile != 0:
            tile -= 8
    else:
        tile = rows
    grid = (rows // tile,)

    out2 = pl.pallas_call(
        _identity_copy_kernel,
        out_shape=jax.ShapeDtypeStruct((rows, cols), x.dtype),
        grid_spec=pltpu.PrefetchScalarGridSpec(
            num_scalar_prefetch=0,
            grid=grid,
            in_specs=[pl.BlockSpec((tile, cols), lambda i: (i, 0))],
            out_specs=pl.BlockSpec((tile, cols), lambda i: (i, 0)),
        ),
        compiler_params=pltpu.CompilerParams(
            dimension_semantics=("parallel",),
        ),
    )(x2)

    return out2.reshape(B, D)


if __name__ == "__main__":
    # Hs[0] == Hs[1] == ... == Hs[-2] is required for the reference forward
    # (which calls every layer on the original x) to be shape-valid.
    Hs = [32, 32, 32, 16]
    B = 16

    key = jax.random.PRNGKey(0)
    n_layers = len(Hs) - 1
    keys = jax.random.split(key, 2 * n_layers + 1)

    # Deterministic init mirroring nn.Linear's default U(-1/sqrt(fan_in), ...).
    # Built only to mirror the module's construction; unused by the kernel
    # because every Linear output in the reference forward is dead.
    params = []
    for i, (h_in, h_out) in enumerate(zip(Hs[:-1], Hs[1:])):
        bound = 1.0 / (h_in ** 0.5)
        w = jax.random.uniform(keys[2 * i], (h_out, h_in), jnp.float32, -bound, bound)
        b = jax.random.uniform(keys[2 * i + 1], (1, h_out), jnp.float32, -bound, bound)
        params.append((w, b))

    x = jax.random.normal(keys[-1], (B, Hs[0]), dtype=jnp.float32)

    out = neural_network_forward(x, params)
    jax.block_until_ready(out)

    # Reference semantics: forward returns lastlayeractfn(x) = Identity(x) = x.
    assert out.shape == x.shape
    assert jnp.allclose(out, x), "output must equal Identity(x) per reference forward"
    print("KERNEL_OK")
</pallas_src>

<mosaic_0001>
module attributes {stable_mosaic.version = 11 : i64} {
  func.func @_identity_copy_kernel(%arg0: i32, %arg1: memref<4x128xf32, #tpu.memory_space<vmem>>, %arg2: memref<4x128xf32, #tpu.memory_space<vmem>>) attributes {dimension_semantics = [#tpu.dimension_semantics<parallel>], iteration_bounds = array<i64: 1>, scalar_prefetch = 0 : i64, scratch_operands = 0 : i64, tpu.core_type = #tpu.core_type<tc>, window_params = [{transform_indices = @transform_0, window_bounds = array<i64: 4, 128>}, {transform_indices = @transform_1, window_bounds = array<i64: 4, 128>}]} {
    %c0 = arith.constant 0 : index
    %c0_0 = arith.constant 0 : index
    %0 = vector.load %arg1[%c0, %c0_0] : memref<4x128xf32, #tpu.memory_space<vmem>>, vector<4x128xf32>
    %c0_1 = arith.constant 0 : index
    %c0_2 = arith.constant 0 : index
    %1 = vector.load %arg2[%c0_1, %c0_2] : memref<4x128xf32, #tpu.memory_space<vmem>>, vector<4x128xf32>
    tpu.vector_store %arg2[%c0_1, %c0_2], %0 {strides = array<i32>} : memref<4x128xf32, #tpu.memory_space<vmem>>, vector<4x128xf32>,
    return
  }
  func.func @transform_0(%arg0: i32) -> (i32, i32) {
    %c0_i32 = arith.constant 0 : i32
    %c0_i32_0 = arith.constant 0 : i32
    return %arg0, %c0_i32 : i32, i32
  }
  func.func @transform_1(%arg0: i32) -> (i32, i32) {
    %c0_i32 = arith.constant 0 : i32
    %c0_i32_0 = arith.constant 0 : i32
    return %arg0, %c0_i32 : i32, i32
  }
}

</mosaic_0001>

<llo_original>
// kernel: tpu_custom_call.1
$region0: #{tpu_custom_call.1}
  #allocation0 [shape = 'u32[]', space=smem, size = 0x4, offset = 0x4, fixed_abs, tag = 'smem constant byte address 0x4 - core index']
  #allocation1 [shape = 'u32[144,128]{1,0:T(1,128)}', space=vmem, size = 0x12000, scoped, tag = 'internal scratch']
  %s0 = inlined_call_operand.hbm [shape: f32[4,128], index: 0, kind: input, shape index: {}]
  %s1 = inlined_call_operand.hbm [shape: f32[4,128], index: 1, kind: output, shape index: {}]
  %s2 = sld [smem:[#allocation0]]
  $region18: #{tpu_custom_call.1} parent=0
    _
  %s4 = ssub.s32 1, %s2
  %s5 = scalar_select 0, %s4, %s2
  $region1: #{tpu_custom_call.1} parent=0
    #allocation2 [shape = 'u8[2048]{0}', space=vmem, size = 0x800, scoped, tag = 'input window, operand 0, single buffered']
    #allocation3 [shape = 's32[1]{0}', space=sflag, size = 0x4, scoped, tag = 'scoped memory for tpu_custom_call.1']
    #allocation4 [shape = 's32[1]{0}', space=sflag, size = 0x4, scoped, tag = 'scoped memory for tpu_custom_call.1']
    #allocation5 [shape = 'u8[2048]{0}', space=vmem, size = 0x800, scoped, tag = 'output window, operand 0, single buffered']
    %6 = vsyncpa [#allocation3], 0
    %7 = vsyncpa [#allocation4], 0
    // Predicated region
    $region2: #{tpu_custom_call.1} parent=1 // pred_check
      _
    $region3: #{tpu_custom_call.1} parent=1 // pred_check_branch
      %9 = sbr.rel (0) target = $region5
    $region4: #{tpu_custom_call.1} parent=1 // pred_region
      %s11 = ssub.s32 64, 64
      %12 = vsyncadd [#allocation3], %s11
      %s14 = sshll.u32 [#allocation2], 4
      %s15 = int_to_ptr.vmem [resolvable:$true] %s14
      %17 = dma.hbm_to_vmem [thread:$0]  %s0, 64, %s15, [#allocation3]
    $region5: #{tpu_custom_call.1} parent=1 // pred_fallthru
      _
    // Predicated region
    $region6: #{tpu_custom_call.1} parent=1 // pred_check
      _
    $region7: #{tpu_custom_call.1} parent=1 // pred_check_branch
      %19 = sbr.rel (0) target = $region9
    $region8: #{tpu_custom_call.1} parent=1 // pred_region
      %20 = dma.done [#allocation3], 64
    $region9: #{tpu_custom_call.1} parent=1 // pred_fallthru
      _
    %v21 = vld [vmem:[#allocation2] sm:$0xf]
    %22 = vst [vmem:[#allocation5] sm:$0xf] %v21
    // Predicated region
    $region10: #{tpu_custom_call.1} parent=1 // pred_check
      _
    $region11: #{tpu_custom_call.1} parent=1 // pred_check_branch
      %24 = sbr.rel (0) target = $region13
    $region12: #{tpu_custom_call.1} parent=1 // pred_region
      %s26 = ssub.s32 64, 64
      %27 = vsyncadd [#allocation4], %s26
      %s29 = sshll.u32 [#allocation5], 4
      %s30 = int_to_ptr.vmem [resolvable:$true] %s29
      %32 = dma.vmem_to_hbm [thread:$0]  %s30, 64, %s1, [#allocation4]
    $region13: #{tpu_custom_call.1} parent=1 // pred_fallthru
      _
    // Predicated region
    $region14: #{tpu_custom_call.1} parent=1 // pred_check
      _
    $region15: #{tpu_custom_call.1} parent=1 // pred_check_branch
      %34 = sbr.rel (0) target = $region17
    $region16: #{tpu_custom_call.1} parent=1 // pred_region
      %35 = dma.done [#allocation4], 64
    $region17: #{tpu_custom_call.1} parent=1 // pred_fallthru
      _
    %36 = vsyncpa [#allocation3], 1
    %37 = vsyncpa [#allocation4], 1

</llo_original>
